<compile_context>
chip_gen: v5e
topology: v5e:2x2
jax: 0.10.0
libtpu: 0.0.40
codegen_flags: <defaults>
</compile_context>

<pallas_src>
import functools

import jax
import jax.numpy as jnp
from jax import lax
from jax.experimental import pallas as pl
from jax.experimental.pallas import tpu as pltpu

_LANES = 128
_MXU_DTYPE = jnp.bfloat16   # MXU operand dtype; accumulation stays f32.


def _round_up(x, m):
    return (x + m - 1) // m * m


# --------------------------------------------------------------------------
# ConvTranspose2d(kernel=2, stride=2) + bias
# --------------------------------------------------------------------------
def _up2x2_kernel(x_ref, w_ref, b_ref, o_ref, *, th, w2, cin, cp):
    # x_ref: (th, w2, cin)   w_ref: (cin, 4*cp)   b_ref: (1, 4*cp)
    # o_ref: (th, 2, w2, 2*cp)  -> index order (h, dh, w, dw*cp + cout)
    x = x_ref[...].reshape(th * w2, cin).astype(_MXU_DTYPE)
    y = jnp.dot(x, w_ref[...], preferred_element_type=jnp.float32)
    y = y + b_ref[...]
    for dh in range(2):
        y_dh = y[:, dh * 2 * cp:(dh + 1) * 2 * cp]          # 128-aligned slice
        o_ref[:, dh, :, :] = y_dh.reshape(th, w2, 2 * cp).astype(o_ref.dtype)


def conv_transpose_2x2(x_nhwc, weight, bias):
    """ConvTranspose2d(k=2, s=2, bias=True).  x: (N,H,W,Cin) ->
    (N, 2H, 2W, Cp) with the real Cout channels first (rest zero)."""
    n, h, w, cin = x_nhwc.shape
    cin_w, cout, kh, kw = weight.shape
    assert (kh, kw) == (2, 2) and cin_w == cin
    cp = _round_up(cout, _LANES)

    # (Cin, Cout, 2, 2) -> (Cin, dh, dw, Cp) -> (Cin, 4*Cp); columns ordered
    # (dh, dw, cout) so y = x @ wmat scatters straight into the output layout.
    wmat = jnp.transpose(weight, (0, 2, 3, 1))
    wmat = jnp.pad(wmat, ((0, 0), (0, 0), (0, 0), (0, cp - cout)))
    wmat = wmat.reshape(cin, 4 * cp).astype(_MXU_DTYPE)
    bvec = jnp.tile(jnp.pad(bias, (0, cp - cout)).astype(jnp.float32), 4)
    bvec = bvec.reshape(1, 4 * cp)

    th = min(8, h)
    h_pad = _round_up(h, th)
    if h_pad != h:
        x_nhwc = jnp.pad(x_nhwc, ((0, 0), (0, h_pad - h), (0, 0), (0, 0)))
    grid = (n, h_pad // th)

    kern = functools.partial(_up2x2_kernel, th=th, w2=w, cin=cin, cp=cp)
    out = pl.pallas_call(
        kern,
        grid=grid,
        in_specs=[
            pl.BlockSpec((None, th, w, cin), lambda b, r: (b, r, 0, 0)),
            pl.BlockSpec((cin, 4 * cp), lambda b, r: (0, 0)),
            pl.BlockSpec((1, 4 * cp), lambda b, r: (0, 0)),
        ],
        out_specs=pl.BlockSpec((None, th, 2, w, 2 * cp),
                               lambda b, r: (b, r, 0, 0, 0)),
        out_shape=jax.ShapeDtypeStruct((n, h_pad, 2, w, 2 * cp), jnp.float32),
        compiler_params=pltpu.CompilerParams(
            dimension_semantics=("parallel", "parallel"),
            vmem_limit_bytes=32 * 1024 * 1024),
    )(x_nhwc, wmat, bvec)

    # (N, Hp, 2, W, 2*Cp) is already in (n, 2h+dh, 2w+dw, c) row-major order.
    out = out.reshape(n, 2 * h_pad, 2 * w, cp)
    return out[:, :2 * h, :, :]


# --------------------------------------------------------------------------
# Conv2d(k=3, s=1, p=0, bias=True) + ReLU, fused (in-VMEM patch extraction)
# --------------------------------------------------------------------------
def _conv3x3_kernel(x_ref, w_ref, b_ref, o_ref, *, th, wout, cin, cp, relu):
    # x_ref: (hin_pad, win, cin)  w_ref: (3, 3, cin, cp)  b_ref: (1, cp)
    # o_ref: (th, wout, cp)
    r0 = pl.multiple_of(pl.program_id(1) * th, th)
    acc = jnp.zeros((th * wout, cp), jnp.float32)
    for kh in range(3):
        rows = x_ref[pl.ds(r0 + kh, th)]                  # (th, win, cin)
        for kw in range(3):
            xs = rows[:, kw:kw + wout, :].reshape(th * wout, cin)
            acc = acc + jnp.dot(xs.astype(_MXU_DTYPE), w_ref[kh, kw],
                                preferred_element_type=jnp.float32)
    y = acc + b_ref[...]
    if relu:
        y = jnp.maximum(y, 0.0)
    o_ref[...] = y.reshape(th, wout, cp).astype(o_ref.dtype)


def conv3x3_relu(x_nhwc, weight, bias, *, relu=True):
    """Valid 3x3 conv + bias (+ReLU).  The input may carry zero-padded channels
    beyond the weight's in-channels (they are matched with zero weights); the
    output channel dim is padded to a multiple of 128 lanes (real Cout first)."""
    n, hin, win, cin_x = x_nhwc.shape
    cout, cin_w, kh, kw = weight.shape
    assert (kh, kw) == (3, 3) and cin_w <= cin_x
    hout, wout = hin - 2, win - 2
    cp = _round_up(cout, _LANES)

    # (Cout, Cin, 3, 3) -> (3, 3, Cin_x, Cp); zero-pad both channel dims.
    wmat = jnp.transpose(weight, (2, 3, 1, 0))
    wmat = jnp.pad(wmat, ((0, 0), (0, 0), (0, cin_x - cin_w), (0, cp - cout)))
    wmat = wmat.astype(_MXU_DTYPE)
    bvec = jnp.pad(bias, (0, cp - cout)).astype(jnp.float32).reshape(1, cp)

    th = min(8, hout)
    hout_pad = _round_up(hout, th)
    hin_pad = hout_pad + 2
    if hin_pad != hin:
        x_nhwc = jnp.pad(x_nhwc, ((0, 0), (0, hin_pad - hin), (0, 0), (0, 0)))
    grid = (n, hout_pad // th)

    kern = functools.partial(_conv3x3_kernel, th=th, wout=wout, cin=cin_x,
                             cp=cp, relu=relu)
    out = pl.pallas_call(
        kern,
        grid=grid,
        in_specs=[
            # Whole image per batch element; fetched once per n and re-used
            # across the row-tile axis by the auto pipeline (no halo DMA).
            pl.BlockSpec((None, hin_pad, win, cin_x), lambda b, r: (b, 0, 0, 0)),
            pl.BlockSpec((3, 3, cin_x, cp), lambda b, r: (0, 0, 0, 0)),
            pl.BlockSpec((1, cp), lambda b, r: (0, 0)),
        ],
        out_specs=pl.BlockSpec((None, th, wout, cp), lambda b, r: (b, r, 0, 0)),
        out_shape=jax.ShapeDtypeStruct((n, hout_pad, wout, cp), jnp.float32),
        compiler_params=pltpu.CompilerParams(
            dimension_semantics=("parallel", "parallel"),
            vmem_limit_bytes=32 * 1024 * 1024),
    )(x_nhwc, wmat, bvec)
    return out[:, :hout, :, :]        # (N, Hout, Wout, Cp)


# --------------------------------------------------------------------------
# unetUp forward
# --------------------------------------------------------------------------
def unet_up_forward(inputs1, inputs2, params, *, is_deconv=True):
    """unetUp.forward (NCHW in / NCHW out)."""
    if not is_deconv:
        # TODO(synk): nn.UpsamplingBilinear2d(scale_factor=2) path not implemented.
        raise NotImplementedError("only the is_deconv=True path is implemented")

    n, _, h2, w2 = inputs2.shape
    _, c1, h1, w1 = inputs1.shape

    # self.up(inputs2)
    x2 = jnp.transpose(inputs2, (0, 2, 3, 1))                    # NHWC
    up = conv_transpose_2x2(x2, params["up_w"], params["up_b"])
    cout_up = params["up_w"].shape[1]
    up = up[:, :, :, :cout_up]                                   # drop lane pad

    # F.pad(inputs1, 2*[offset//2, offset//2]) and channel concat
    offset = 2 * h2 - h1
    assert offset == 2 * w2 - w1 and offset % 2 == 0 and offset >= 0
    o2 = offset // 2
    x1 = jnp.transpose(inputs1, (0, 2, 3, 1))
    x1 = jnp.pad(x1, ((0, 0), (o2, o2), (o2, o2), (0, 0)))
    x = jnp.concatenate([x1, up], axis=-1)                       # (N,2H2,2W2,C)

    # unetConv2(in_size, out_size, is_batchnorm=False): conv+ReLU, conv+ReLU.
    # The padded (lane-dense) channel dim is carried from conv1 into conv2.
    y = conv3x3_relu(x, params["conv1_w"], params["conv1_b"])
    y = conv3x3_relu(y, params["conv2_w"], params["conv2_b"])

    cout = params["conv2_w"].shape[0]
    y = y[:, :, :, :cout]                                        # drop lane pad
    return jnp.transpose(y, (0, 3, 1, 2))                        # NCHW


# --------------------------------------------------------------------------
# Pure-JAX reference (f32) for verification
# --------------------------------------------------------------------------
def _reference_forward(inputs1, inputs2, params):
    w_up, b_up = params["up_w"], params["up_b"]
    n, _, h2, w2 = inputs2.shape
    cout = w_up.shape[1]
    up = jnp.einsum("nchw,codl->nohdwl", inputs2, w_up)
    up = up.reshape(n, cout, 2 * h2, 2 * w2) + b_up[None, :, None, None]

    offset = 2 * h2 - inputs1.shape[2]
    o2 = offset // 2
    x1 = jnp.pad(inputs1, ((0, 0), (0, 0), (o2, o2), (o2, o2)))
    x = jnp.concatenate([x1, up], axis=1)

    def conv(z, w, b):
        y = lax.conv_general_dilated(
            z, w, (1, 1), "VALID",
            dimension_numbers=("NCHW", "OIHW", "NCHW"))
        return jnp.maximum(y + b[None, :, None, None], 0.0)

    y = conv(x, params["conv1_w"], params["conv1_b"])
    return conv(y, params["conv2_w"], params["conv2_b"])


if __name__ == "__main__":
    key = jax.random.PRNGKey(0)
    in_size, out_size = 8, 4
    n = 2
    h2 = w2 = 8        # inputs2 spatial; up -> 16x16
    h1 = w1 = 14       # inputs1 spatial; padded by 1 each side -> 16x16
    ks = jax.random.split(key, 8)

    inputs1 = jax.random.normal(ks[0], (n, in_size - out_size, h1, w1), jnp.float32)
    inputs2 = jax.random.normal(ks[1], (n, in_size, h2, w2), jnp.float32)
    params = {
        "up_w": 0.1 * jax.random.normal(ks[2], (in_size, out_size, 2, 2), jnp.float32),
        "up_b": 0.1 * jax.random.normal(ks[3], (out_size,), jnp.float32),
        "conv1_w": 0.1 * jax.random.normal(ks[4], (out_size, in_size, 3, 3), jnp.float32),
        "conv1_b": 0.1 * jax.random.normal(ks[5], (out_size,), jnp.float32),
        "conv2_w": 0.1 * jax.random.normal(ks[6], (out_size, out_size, 3, 3), jnp.float32),
        "conv2_b": 0.1 * jax.random.normal(ks[7], (out_size,), jnp.float32),
    }

    out = unet_up_forward(inputs1, inputs2, params)
    out = jax.block_until_ready(out)
    assert out.shape == (n, out_size, h1 - 2, w1 - 2)
    assert bool(jnp.all(jnp.isfinite(out)))

    ref = _reference_forward(inputs1, inputs2, params)
    err = float(jnp.max(jnp.abs(out - ref)))
    assert err < 0.1, f"max abs err {err}"   # bf16 MXU operands, f32 accumulate
    print("KERNEL_OK")
</pallas_src>

<mosaic_0001>
module attributes {stable_mosaic.version = 11 : i64} {
  func.func @_up2x2_kernel(%arg0: i32, %arg1: i32, %arg2: memref<1x8x8x8xf32, #tpu.memory_space<vmem>>, %arg3: memref<8x512xbf16, #tpu.memory_space<vmem>>, %arg4: memref<1x512xf32, #tpu.memory_space<vmem>>, %arg5: memref<1x8x2x8x256xf32, #tpu.memory_space<vmem>>) attributes {dimension_semantics = [#tpu.dimension_semantics<parallel>, #tpu.dimension_semantics<parallel>], iteration_bounds = array<i64: 2, 1>, scalar_prefetch = 0 : i64, scratch_operands = 0 : i64, tpu.core_type = #tpu.core_type<tc>, window_params = [{transform_indices = @transform_0, window_bounds = array<i64: 1, 8, 8, 8>}, {pipeline_mode = #tpu.pipeline_mode<synchronous>, transform_indices = @transform_1, window_bounds = array<i64: 8, 512>}, {pipeline_mode = #tpu.pipeline_mode<synchronous>, transform_indices = @transform_2, window_bounds = array<i64: 1, 512>}, {transform_indices = @transform_3, window_bounds = array<i64: 1, 8, 2, 8, 256>}]} {
    %c0 = arith.constant 0 : index
    %c0_0 = arith.constant 0 : index
    %c0_1 = arith.constant 0 : index
    %c0_2 = arith.constant 0 : index
    %0 = vector.load %arg2[%c0, %c0_0, %c0_1, %c0_2] : memref<1x8x8x8xf32, #tpu.memory_space<vmem>>, vector<1x8x8x8xf32>
    %1 = vector.shape_cast %0 : vector<1x8x8x8xf32> to vector<8x8x8xf32>
    %2 = vector.shape_cast %1 : vector<8x8x8xf32> to vector<64x8xf32>
    %3 = arith.truncf %2 : vector<64x8xf32> to vector<64x8xbf16>
    %c0_3 = arith.constant 0 : index
    %c0_4 = arith.constant 0 : index
    %4 = vector.load %arg3[%c0_3, %c0_4] : memref<8x512xbf16, #tpu.memory_space<vmem>>, vector<8x512xbf16>
    %cst = arith.constant dense<0.000000e+00> : vector<64x512xf32>
    %5 = tpu.matmul %3, %4, %cst {dimension_numbers = #tpu.dot_dimension_numbers<[1], [0], [0], [1], [0, 0, 1, 1], [], []>} : vector<64x8xbf16>, vector<8x512xbf16>, vector<64x512xf32> -> vector<64x512xf32>
    %c0_5 = arith.constant 0 : index
    %c0_6 = arith.constant 0 : index
    %6 = vector.load %arg4[%c0_5, %c0_6] : memref<1x512xf32, #tpu.memory_space<vmem>>, vector<1x512xf32>
    %7 = vector.broadcast %6 : vector<1x512xf32> to vector<64x512xf32>
    %8 = arith.addf %5, %7 : vector<64x512xf32>
    %9 = vector.extract_strided_slice %8 {offsets = [0, 0], sizes = [64, 256], strides = [1, 1]} : vector<64x512xf32> to vector<64x256xf32>
    %10 = vector.shape_cast %9 : vector<64x256xf32> to vector<8x8x256xf32>
    %c0_7 = arith.constant 0 : index
    %c0_8 = arith.constant 0 : index
    %c0_9 = arith.constant 0 : index
    %c0_10 = arith.constant 0 : index
    %c0_11 = arith.constant 0 : index
    %11 = vector.load %arg5[%c0_7, %c0_8, %c0_9, %c0_10, %c0_11] : memref<1x8x2x8x256xf32, #tpu.memory_space<vmem>>, vector<1x8x1x8x256xf32>
    %12 = vector.shape_cast %11 : vector<1x8x1x8x256xf32> to vector<8x8x256xf32>
    %13 = vector.shape_cast %10 : vector<8x8x256xf32> to vector<1x8x1x8x256xf32>
    tpu.vector_store %arg5[%c0_7, %c0_8, %c0_9, %c0_10, %c0_11], %13 {strides = array<i32>} : memref<1x8x2x8x256xf32, #tpu.memory_space<vmem>>, vector<1x8x1x8x256xf32>,
    %14 = vector.extract_strided_slice %8 {offsets = [0, 256], sizes = [64, 256], strides = [1, 1]} : vector<64x512xf32> to vector<64x256xf32>
    %15 = vector.shape_cast %14 : vector<64x256xf32> to vector<8x8x256xf32>
    %c0_12 = arith.constant 0 : index
    %c0_13 = arith.constant 0 : index
    %c1 = arith.constant 1 : index
    %c0_14 = arith.constant 0 : index
    %c0_15 = arith.constant 0 : index
    %16 = vector.load %arg5[%c0_12, %c0_13, %c1, %c0_14, %c0_15] : memref<1x8x2x8x256xf32, #tpu.memory_space<vmem>>, vector<1x8x1x8x256xf32>
    %17 = vector.shape_cast %16 : vector<1x8x1x8x256xf32> to vector<8x8x256xf32>
    %18 = vector.shape_cast %15 : vector<8x8x256xf32> to vector<1x8x1x8x256xf32>
    tpu.vector_store %arg5[%c0_12, %c0_13, %c1, %c0_14, %c0_15], %18 {strides = array<i32>} : memref<1x8x2x8x256xf32, #tpu.memory_space<vmem>>, vector<1x8x1x8x256xf32>,
    return
  }
  func.func @transform_0(%arg0: i32, %arg1: i32) -> (i32, i32, i32, i32) {
    %c0_i32 = arith.constant 0 : i32
    %c0_i32_0 = arith.constant 0 : i32
    %c0_i32_1 = arith.constant 0 : i32
    return %arg0, %arg1, %c0_i32, %c0_i32_0 : i32, i32, i32, i32
  }
  func.func @transform_1(%arg0: i32, %arg1: i32) -> (i32, i32) {
    %c0_i32 = arith.constant 0 : i32
    %c0_i32_0 = arith.constant 0 : i32
    %c0_i32_1 = arith.constant 0 : i32
    return %c0_i32, %c0_i32_0 : i32, i32
  }
  func.func @transform_2(%arg0: i32, %arg1: i32) -> (i32, i32) {
    %c0_i32 = arith.constant 0 : i32
    %c0_i32_0 = arith.constant 0 : i32
    %c0_i32_1 = arith.constant 0 : i32
    return %c0_i32, %c0_i32_0 : i32, i32
  }
  func.func @transform_3(%arg0: i32, %arg1: i32) -> (i32, i32, i32, i32, i32) {
    %c0_i32 = arith.constant 0 : i32
    %c0_i32_0 = arith.constant 0 : i32
    %c0_i32_1 = arith.constant 0 : i32
    %c0_i32_2 = arith.constant 0 : i32
    return %arg0, %arg1, %c0_i32, %c0_i32_0, %c0_i32_1 : i32, i32, i32, i32, i32
  }
}

</mosaic_0001>

<llo_original>
// kernel: tpu_custom_call.1
$region0: #{tpu_custom_call.1}
  #allocation0 [shape = 'u32[]', space=smem, size = 0x4, offset = 0x4, fixed_abs, tag = 'smem constant byte address 0x4 - core index']
  #allocation1 [shape = 'u32[72,128]{1,0:T(1,128)}', space=vmem, size = 0x9000, scoped, tag = 'internal scratch']
  %s0 = inlined_call_operand.hbm [shape: f32[2,8,8,8], index: 0, kind: input, shape index: {}]
  %s1 = inlined_call_operand.hbm [shape: bf16[8,512], index: 1, kind: input, shape index: {}]
  %s2 = inlined_call_operand.hbm [shape: f32[1,512], index: 2, kind: input, shape index: {}]
  %s3 = inlined_call_operand.hbm [shape: f32[2,8,2,8,256], index: 3, kind: output, shape index: {}]
  %s4 = sld [smem:[#allocation0]]
  $region57: #{tpu_custom_call.1} parent=0
    _
  %s6 = ssub.s32 1, %s4
  %s7 = scalar_select 0, %s6, %s4
  $region1: #{tpu_custom_call.1} parent=0
    #allocation2 [shape = 'u8[65536]{0}', space=vmem, size = 0x10000, scoped, tag = 'input window, operand 0']
    #allocation3 [shape = 's32[2]{0}', space=sflag, size = 0x8, scoped, tag = 'scoped memory for tpu_custom_call.1']
    #allocation4 [shape = 's32[2]{0}', space=sflag, size = 0x8, scoped, tag = 'scoped memory for tpu_custom_call.1']
    #allocation5 [shape = 'u8[8192]{0}', space=vmem, size = 0x2000, scoped, tag = 'input window, operand 1, single buffered']
    #allocation6 [shape = 's32[1]{0}', space=sflag, size = 0x4, scoped, tag = 'scoped memory for tpu_custom_call.1']
    #allocation7 [shape = 'u8[2048]{0}', space=vmem, size = 0x800, scoped, tag = 'input window, operand 2, single buffered']
    #allocation8 [shape = 'u8[262144]{0}', space=vmem, size = 0x40000, scoped, tag = 'output window, operand 0']
    %8 = vsyncpa [#allocation3], 0
    %s9 = scalar_lea.sflag [#allocation3], 1
    %10 = vsyncpa %s9, 0
    %11 = vsyncpa [#allocation6], 0
    %12 = vsyncpa [#allocation4], 0
    %s13 = scalar_lea.sflag [#allocation4], 1
    %14 = vsyncpa %s13, 0
    loop: start=0, step=1, limit=4
    $region2: #{tpu_custom_call.1} parent=1 // loop_pre_header
      _
    $region3: #{tpu_custom_call.1} parent=1 // loop_header
      %s16 = sphi 0, %s20
      %p17 = scmp.ge.s32.totalorder %s16, 4
      %s23 = sphi 0, %s35
      %s24 = sphi 0, %s31
      %s25 = sphi 0, %s23
      %s26 = sphi 0, %s24
      %s27 = sphi 0, %s25
      %s28 = sphi 0, %s26
      %s40 = sphi 0, %s42
      %s43 = sphi 0, %s40
      %s44 = sphi 0, %s43
      %s60 = sphi 0, %s44
      %s64 = sphi 0, %s64
      %s66 = sphi 0, %s64
      %s67 = sphi 0, %s66
      %s81 = sphi 0, %s67
      %s85 = sphi 0, %s85
      %s87 = sphi 0, %s85
      %s88 = sphi 0, %s87
      %s102 = sphi 0, %s88
      %s110 = sphi 0, %s112
      %s113 = sphi 0, %s110
      %s114 = sphi 0, %s113
      %s130 = sphi 0, %s114
    $region4: #{tpu_custom_call.1} parent=1 // loop_header_branch
      %19 = sbr.rel (%p17) target = $region8
    $region5: #{tpu_custom_call.1} parent=1 // loop_body
      %s21 = ssub.s32 %s16, 1
      %s22 = ssub.s32 %s16, 2
      %s29 = sadd.s32 1, %s24
      %p30 = scmp.ge.s32.totalorder %s29, 1
      %s31 = scalar_select %p30, 0, %s29
      %s32 = sadd.s32 1, %s23
      %s33 = scalar_select %p30, %s32, %s23
      %p34 = scmp.ge.s32.totalorder %s33, 2
      %s35 = scalar_select %p34, 0, %s33
      %s36 = ssub.s32 %s23, %s35
      %s37 = ssub.s32 %s24, %s31
      %s38 = sor.u32 %s36, %s37
      %p39 = scmp.eq.s32.totalorder %s38, 0
      %s41 = sadd.s32 %s40, 1
      %s42 = scalar_select %p39, %s40, %s41
      %p45 = pneg %p39
      %p46 = scmp.eq.s32.totalorder %s16, 1
      %p47 = por %p45, %p46
      %p48 = scmp.ne.s32.totalorder %s40, %s43
      %p49 = scmp.eq.s32.totalorder %s16, 0
      %p50 = por %p48, %p49
      %p51 = scmp.ne.s32.totalorder %s40, %s43
      %p52 = scmp.eq.s32.totalorder %s21, 1
      %p53 = por %p51, %p52
      %p54 = scmp.ne.s32.totalorder %s43, %s44
      %p55 = scmp.eq.s32.totalorder %s21, 0
      %p56 = por %p54, %p55
      %p57 = scmp.ne.s32.totalorder %s43, %s44
      %p58 = scmp.eq.s32.totalorder %s22, 1
      %p59 = por %p57, %p58
      %p61 = scmp.ne.s32.totalorder %s44, %s60
      %p62 = scmp.eq.s32.totalorder %s22, 0
      %p63 = por %p61, %p62
      %s65 = sadd.s32 %s64, 1
      %p68 = scmp.eq.s32.totalorder %s16, 1
      %p69 = scmp.ne.s32.totalorder %s64, %s66
      %p70 = scmp.eq.s32.totalorder %s16, 0
      %p71 = por %p69, %p70
      %p72 = scmp.ne.s32.totalorder %s64, %s66
      %p73 = scmp.eq.s32.totalorder %s21, 1
      %p74 = por %p72, %p73
      %p75 = scmp.ne.s32.totalorder %s66, %s67
      %p76 = scmp.eq.s32.totalorder %s21, 0
      %p77 = por %p75, %p76
      %p78 = scmp.ne.s32.totalorder %s66, %s67
      %p79 = scmp.eq.s32.totalorder %s22, 1
      %p80 = por %p78, %p79
      %p82 = scmp.ne.s32.totalorder %s67, %s81
      %p83 = scmp.eq.s32.totalorder %s22, 0
      %p84 = por %p82, %p83
      %s86 = sadd.s32 %s85, 1
      %p89 = scmp.eq.s32.totalorder %s16, 1
      %p90 = scmp.ne.s32.totalorder %s85, %s87
      %p91 = scmp.eq.s32.totalorder %s16, 0
      %p92 = por %p90, %p91
      %p93 = scmp.ne.s32.totalorder %s85, %s87
      %p94 = scmp.eq.s32.totalorder %s21, 1
      %p95 = por %p93, %p94
      %p96 = scmp.ne.s32.totalorder %s87, %s88
      %p97 = scmp.eq.s32.totalorder %s21, 0
      %p98 = por %p96, %p97
      %p99 = scmp.ne.s32.totalorder %s87, %s88
      %p100 = scmp.eq.s32.totalorder %s22, 1
      %p101 = por %p99, %p100
      %p103 = scmp.ne.s32.totalorder %s88, %s102
      %p104 = scmp.eq.s32.totalorder %s22, 0
      %p105 = por %p103, %p104
      %s106 = ssub.s32 %s23, %s35
      %s107 = ssub.s32 %s24, %s31
      %s108 = sor.u32 %s106, %s107
      %p109 = scmp.eq.s32.totalorder %s108, 0
      %s111 = sadd.s32 %s110, 1
      %s112 = scalar_select %p109, %s110, %s111
      %p115 = pneg %p109
      %p116 = scmp.eq.s32.totalorder %s16, 1
      %p117 = por %p115, %p116
      %p118 = scmp.ne.s32.totalorder %s110, %s113
      %p119 = scmp.eq.s32.totalorder %s16, 0
      %p120 = por %p118, %p119
      %p121 = scmp.ne.s32.totalorder %s110, %s113
      %p122 = scmp.eq.s32.totalorder %s21, 1
      %p123 = por %p121, %p122
      %p124 = scmp.ne.s32.totalorder %s113, %s114
      %p125 = scmp.eq.s32.totalorder %s21, 0
      %p126 = por %p124, %p125
      %p127 = scmp.ne.s32.totalorder %s113, %s114
      %p128 = scmp.eq.s32.totalorder %s22, 1
      %p129 = por %p127, %p128
      %p131 = scmp.ne.s32.totalorder %s114, %s130
      %p132 = scmp.eq.s32.totalorder %s22, 0
      %p133 = por %p131, %p132
      %p134 = scmp.le.s32.totalorder 1, %s16
      %p135 = scmp.lt.s32.totalorder %s16, 3
      %p136 = pnand %p134, %p135
      %p137 = pneg %p136
      // Predicated region
      $region9: #{tpu_custom_call.1} parent=5 // pred_check
        _
      $region10: #{tpu_custom_call.1} parent=5 // pred_check_branch
        %139 = sbr.rel (%p136) target = $region12
      $region11: #{tpu_custom_call.1} parent=5 // pred_region
        %s140 = ssub.s32 %s16, 1
        // Predicated region
        $region13: #{tpu_custom_call.1} parent=11 // pred_check
          %p141 = pneg %p77
        $region14: #{tpu_custom_call.1} parent=11 // pred_check_branch
          %143 = sbr.rel (%p141) target = $region16
        $region15: #{tpu_custom_call.1} parent=11 // pred_region
          %145 = vsyncadd [#allocation6], 0
          %s147 = sshll.u32 %s1, 4
          %s148 = int_to_ptr.hbm [resolvable:$true] %s147
          %s149 = sshll.u32 [#allocation5], 4
          %s150 = int_to_ptr.vmem [resolvable:$true] %s149
          %152 = dma.hbm_to_vmem [thread:$0]  %s148, 256, %s150, [#allocation6]
        $region16: #{tpu_custom_call.1} parent=11 // pred_fallthru
          _
        // Predicated region
        $region17: #{tpu_custom_call.1} parent=11 // pred_check
          %p153 = pneg %p98
        $region18: #{tpu_custom_call.1} parent=11 // pred_check_branch
          %155 = sbr.rel (%p153) target = $region20
        $region19: #{tpu_custom_call.1} parent=11 // pred_region
          %157 = vsyncadd [#allocation6], 0
          %s159 = sshll.u32 %s2, 4
          %s160 = int_to_ptr.hbm [resolvable:$true] %s159
          %s161 = sshll.u32 [#allocation7], 4
          %s162 = int_to_ptr.vmem [resolvable:$true] %s161
          %164 = dma.hbm_to_vmem [thread:$0]  %s160, 64, %s162, [#allocation6]
        $region20: #{tpu_custom_call.1} parent=11 // pred_fallthru
          _
      $region12: #{tpu_custom_call.1} parent=5 // pred_fallthru
        _
      %p165 = scmp.lt.s32.totalorder %s16, 2
      // Predicated region
      $region21: #{tpu_custom_call.1} parent=5 // pred_check
        %p166 = pneg %p165
      $region22: #{tpu_custom_call.1} parent=5 // pred_check_branch
        %168 = sbr.rel (%p166) target = $region24
      $region23: #{tpu_custom_call.1} parent=5 // pred_region
        // Predicated region
        $region25: #{tpu_custom_call.1} parent=23 // pred_check
          %p169 = pneg %p50
        $region26: #{tpu_custom_call.1} parent=23 // pred_check_branch
          %171 = sbr.rel (%p169) target = $region28
        $region27: #{tpu_custom_call.1} parent=23 // pred_region
          %s172 = sand.u32 %s40, 1
          %s173 = scalar_lea.sflag [#allocation3], %s172
          %s174 = sand.u32 %s40, 1
          %s175 = smul.addr %s174, 64
          %s176 = scalar_lea.vmem [#allocation2], %s175
          %s177 = smul.u32 8, %s24
          %179 = vsyncadd %s173, 0
          %s180 = smul.addr %s23, 8
          %s181 = sadd.s32 %s177, %s180
          %s182 = smul.addr %s181, 8
          %s183 = scalar_lea.hbm %s0, %s182
          %s184 = sshll.u32 %s183, 4
          %s185 = int_to_ptr.hbm [resolvable:$true] %s184
          %s186 = sshll.u32 %s176, 4
          %s187 = int_to_ptr.vmem [resolvable:$true] %s186
          %192 = dma.hbm_to_vmem [thread:$0]  %s185, 1024, %s187, %s173, 128, 128, 8
        $region28: #{tpu_custom_call.1} parent=23 // pred_fallthru
          _
      $region24: #{tpu_custom_call.1} parent=5 // pred_fallthru
        _
      %p193 = scmp.le.s32.totalorder 1, %s16
      %p194 = scmp.lt.s32.totalorder %s16, 3
      %p195 = pnand %p193, %p194
      %p196 = pneg %p195
      // Predicated region
      $region29: #{tpu_custom_call.1} parent=5 // pred_check
        _
      $region30: #{tpu_custom_call.1} parent=5 // pred_check_branch
        %198 = sbr.rel (%p195) target = $region32
      $region31: #{tpu_custom_call.1} parent=5 // pred_region
        %s199 = ssub.s32 %s16, 1
        %s200 = sand.u32 %s43, 1
        %s201 = scalar_lea.sflag [#allocation3], %s200
        %s202 = sand.u32 %s43, 1
        %s203 = smul.addr %s202, 64
        %s204 = scalar_lea.vmem [#allocation2], %s203
        // Predicated region
        $region33: #{tpu_custom_call.1} parent=31 // pred_check
          %p205 = pneg %p56
        $region34: #{tpu_custom_call.1} parent=31 // pred_check_branch
          %207 = sbr.rel (%p205) target = $region36
        $region35: #{tpu_custom_call.1} parent=31 // pred_region
          %209 = dma.done %s201, 1024
        $region36: #{tpu_custom_call.1} parent=31 // pred_fallthru
          _
        // Predicated region
        $region37: #{tpu_custom_call.1} parent=31 // pred_check
          %p210 = pneg %p77
        $region38: #{tpu_custom_call.1} parent=31 // pred_check_branch
          %212 = sbr.rel (%p210) target = $region40
        $region39: #{tpu_custom_call.1} parent=31 // pred_region
          %214 = dma.done [#allocation6], 256
        $region40: #{tpu_custom_call.1} parent=31 // pred_fallthru
          _
        // Predicated region
        $region41: #{tpu_custom_call.1} parent=31 // pred_check
          %p215 = pneg %p98
        $region42: #{tpu_custom_call.1} parent=31 // pred_check_branch
          %217 = sbr.rel (%p215) target = $region44
        $region43: #{tpu_custom_call.1} parent=31 // pred_region
          %219 = dma.done [#allocation6], 64
        $region44: #{tpu_custom_call.1} parent=31 // pred_fallthru
          _
        %s220 = sand.u32 %s43, 1
        %s221 = scalar_lea.sflag [#allocation3], %s220
        %s222 = sand.u32 %s43, 1
        %s223 = smul.addr %s222, 64
        %s224 = scalar_lea.vmem [#allocation2], %s223
        %p225 = pneg %p56
        %p226 = pneg %p53
        %p227 = pneg %p77
        %p228 = pneg %p74
        %p229 = pneg %p98
        %p230 = pneg %p95
        %p231 = pneg %p126
        %p232 = pneg %p123
        %s233 = sand.u32 %s113, 1
        %s234 = scalar_lea.sflag [#allocation4], %s233
        %s235 = sand.u32 %s113, 1
        %s236 = smul.addr %s235, 256
        %s237 = scalar_lea.vmem [#allocation8], %s236
        %s238 = smul.u32 8, %s26
        %s239 = smul.u32 8, %s26
        %v241 = vld [vmem:[%s204] sm:$0xff]
        %v242 = vld [vmem:[%s204 + $0x8] sm:$0xff]
        %v243 = vld [vmem:[%s204 + $0x10] sm:$0xff]
        %v244 = vld [vmem:[%s204 + $0x18] sm:$0xff]
        %v245 = vld [vmem:[%s204 + $0x20] sm:$0xff]
        %v246 = vld [vmem:[%s204 + $0x28] sm:$0xff]
        %v247 = vld [vmem:[%s204 + $0x30] sm:$0xff]
        %v248 = vld [vmem:[%s204 + $0x38] sm:$0xff]
        %v249 = vpack.c.bf16 %v242, %v241
        %v250 = vpack.c.bf16 %v244, %v243
        %v251 = vpack.c.bf16 %v246, %v245
        %v252 = vpack.c.bf16 %v248, %v247
        %v253 = vld [vmem:[#allocation5] sm:$0xff]
        %v254 = vld [vmem:[#allocation5 + $0x8] sm:$0xff]
        %v255 = vld [vmem:[#allocation7] sm:$0xf]
        %v257 = vperm.slane %v255, 0
        %v258 = vperm.slane %v255, 1
        %v259 = vperm.slane %v255, 2
        %v260 = vperm.slane %v255, 3
        %v267 = vunpack.c.l.b16 %v253
        %v268 = vunpack.c.h.b16 %v253
        %v269 = vunpack.c.l.b16 %v254
        %v270 = vunpack.c.h.b16 %v254
        %v271 = vpack.c.b16 %v267, %v267
        %v272 = vpack.c.b16 %v268, %v268
        %v273 = vpack.c.b16 %v269, %v269
        %v274 = vpack.c.b16 %v270, %v270
        %vm275 = vcmask 64512
        %v277 = vsel %vm275, %v249, 0
        %v280 = vsel %vm275, %v250, 0
        %v283 = vsel %vm275, %v251, 0
        %v286 = vsel %vm275, %v252, 0
        %vm288 = vcmask 1043456
        %v290 = vsel %vm288, %v271, 0
        %v293 = vsel %vm288, %v272, 0
        %v296 = vsel %vm288, %v273, 0
        %v299 = vsel %vm288, %v274, 0
        %301 = vmatpush.bf16.msra.mxu0 0
        %302 = vmatpush.bf16.msra.mxu0 0
        %303 = vmatpush.bf16.msra.mxu0 0
        %304 = vmatpush.bf16.msra.mxu0 0
        %305 = vmatpush.bf16.msra.mxu0 0
        %306 = vmatpush.bf16.msra.mxu0 0
        %307 = vmatpush.bf16.msra.mxu0 0
        %308 = vmatpush.bf16.msra.mxu0 %v290
        %309 = vmatmul.bf16.gmra.mxu0 %v277
        %v310 = vpop.f32.mrf.mxu0
        %v311 = vadd.f32 %v257, %v310
        %v312 = vpop.f32.mrf.mxu0
        %v313 = vadd.f32 %v257, %v312
        %314 = vmatmul.bf16.gmra.mxu0 %v280
        %v315 = vpop.f32.mrf.mxu0
        %v316 = vadd.f32 %v257, %v315
        %v317 = vpop.f32.mrf.mxu0
        %v318 = vadd.f32 %v257, %v317
        %319 = vmatmul.bf16.gmra.mxu0 %v283
        %v320 = vpop.f32.mrf.mxu0
        %v321 = vadd.f32 %v257, %v320
        %v322 = vpop.f32.mrf.mxu0
        %v323 = vadd.f32 %v257, %v322
        %324 = vmatmul.bf16.gmra.mxu0 %v286
        %v325 = vpop.f32.mrf.mxu0
        %v326 = vadd.f32 %v257, %v325
        %v327 = vpop.f32.mrf.mxu0
        %v328 = vadd.f32 %v257, %v327
        %329 = vdwg.mxu0
        %330 = vmatpush.bf16.msra.mxu0 0
        %331 = vmatpush.bf16.msra.mxu0 0
        %332 = vmatpush.bf16.msra.mxu0 0
        %333 = vmatpush.bf16.msra.mxu0 0
        %334 = vmatpush.bf16.msra.mxu0 0
        %335 = vmatpush.bf16.msra.mxu0 0
        %336 = vmatpush.bf16.msra.mxu0 0
        %337 = vmatpush.bf16.msra.mxu0 %v293
        %338 = vmatmul.bf16.gmra.mxu0 %v277
        %v339 = vpop.f32.mrf.mxu0
        %v340 = vadd.f32 %v258, %v339
        %v341 = vpop.f32.mrf.mxu0
        %v342 = vadd.f32 %v258, %v341
        %343 = vmatmul.bf16.gmra.mxu0 %v280
        %v344 = vpop.f32.mrf.mxu0
        %v345 = vadd.f32 %v258, %v344
        %v346 = vpop.f32.mrf.mxu0
        %v347 = vadd.f32 %v258, %v346
        %348 = vmatmul.bf16.gmra.mxu0 %v283
        %v349 = vpop.f32.mrf.mxu0
        %v350 = vadd.f32 %v258, %v349
        %v351 = vpop.f32.mrf.mxu0
        %v352 = vadd.f32 %v258, %v351
        %353 = vmatmul.bf16.gmra.mxu0 %v286
        %v354 = vpop.f32.mrf.mxu0
        %v355 = vadd.f32 %v258, %v354
        %v356 = vpop.f32.mrf.mxu0
        %v357 = vadd.f32 %v258, %v356
        %358 = vdwg.mxu0
        %359 = vmatpush.bf16.msra.mxu0 0
        %360 = vmatpush.bf16.msra.mxu0 0
        %361 = vmatpush.bf16.msra.mxu0 0
        %362 = vmatpush.bf16.msra.mxu0 0
        %363 = vmatpush.bf16.msra.mxu0 0
        %364 = vmatpush.bf16.msra.mxu0 0
        %365 = vmatpush.bf16.msra.mxu0 0
        %366 = vmatpush.bf16.msra.mxu0 %v296
        %367 = vmatmul.bf16.gmra.mxu0 %v277
        %v368 = vpop.f32.mrf.mxu0
        %v369 = vadd.f32 %v259, %v368
        %v370 = vpop.f32.mrf.mxu0
        %v371 = vadd.f32 %v259, %v370
        %372 = vmatmul.bf16.gmra.mxu0 %v280
        %v373 = vpop.f32.mrf.mxu0
        %v374 = vadd.f32 %v259, %v373
        %v375 = vpop.f32.mrf.mxu0
        %v376 = vadd.f32 %v259, %v375
        %377 = vmatmul.bf16.gmra.mxu0 %v283
        %v378 = vpop.f32.mrf.mxu0
        %v379 = vadd.f32 %v259, %v378
        %v380 = vpop.f32.mrf.mxu0
        %v381 = vadd.f32 %v259, %v380
        %382 = vmatmul.bf16.gmra.mxu0 %v286
        %v383 = vpop.f32.mrf.mxu0
        %v384 = vadd.f32 %v259, %v383
        %v385 = vpop.f32.mrf.mxu0
        %v386 = vadd.f32 %v259, %v385
        %387 = vdwg.mxu0
        %388 = vmatpush.bf16.msra.mxu0 0
        %389 = vmatpush.bf16.msra.mxu0 0
        %390 = vmatpush.bf16.msra.mxu0 0
        %391 = vmatpush.bf16.msra.mxu0 0
        %392 = vmatpush.bf16.msra.mxu0 0
        %393 = vmatpush.bf16.msra.mxu0 0
        %394 = vmatpush.bf16.msra.mxu0 0
        %395 = vmatpush.bf16.msra.mxu0 %v299
        %396 = vmatmul.bf16.gmra.mxu0 %v277
        %v397 = vpop.f32.mrf.mxu0
        %v398 = vadd.f32 %v260, %v397
        %v399 = vpop.f32.mrf.mxu0
        %v400 = vadd.f32 %v260, %v399
        %401 = vmatmul.bf16.gmra.mxu0 %v280
        %v402 = vpop.f32.mrf.mxu0
        %v403 = vadd.f32 %v260, %v402
        %v404 = vpop.f32.mrf.mxu0
        %v405 = vadd.f32 %v260, %v404
        %406 = vmatmul.bf16.gmra.mxu0 %v283
        %v407 = vpop.f32.mrf.mxu0
        %v408 = vadd.f32 %v260, %v407
        %v409 = vpop.f32.mrf.mxu0
        %v410 = vadd.f32 %v260, %v409
        %411 = vmatmul.bf16.gmra.mxu0 %v286
        %v412 = vpop.f32.mrf.mxu0
        %v413 = vadd.f32 %v260, %v412
        %v414 = vpop.f32.mrf.mxu0
        %v415 = vadd.f32 %v260, %v414
        %416 = vdwg.mxu0
        %417 = vst [vmem:[%s237] sm:$0xff] %v311
        %418 = vst [vmem:[%s237 + $0x8] sm:$0xff] %v340
        %419 = vst [vmem:[%s237 + $0x20] sm:$0xff] %v313
        %420 = vst [vmem:[%s237 + $0x28] sm:$0xff] %v342
        %421 = vst [vmem:[%s237 + $0x40] sm:$0xff] %v316
        %422 = vst [vmem:[%s237 + $0x48] sm:$0xff] %v345
        %423 = vst [vmem:[%s237 + $0x60] sm:$0xff] %v318
        %424 = vst [vmem:[%s237 + $0x68] sm:$0xff] %v347
        %425 = vst [vmem:[%s237 + $0x80] sm:$0xff] %v321
        %426 = vst [vmem:[%s237 + $0x88] sm:$0xff] %v350
        %427 = vst [vmem:[%s237 + $0xa0] sm:$0xff] %v323
        %428 = vst [vmem:[%s237 + $0xa8] sm:$0xff] %v352
        %429 = vst [vmem:[%s237 + $0xc0] sm:$0xff] %v326
        %430 = vst [vmem:[%s237 + $0xc8] sm:$0xff] %v355
        %431 = vst [vmem:[%s237 + $0xe0] sm:$0xff] %v328
        %432 = vst [vmem:[%s237 + $0xe8] sm:$0xff] %v357
        %s433 = scalar_lea.vmem %s237, 16 [#allocation8]
        %434 = vst [vmem:[%s433] sm:$0xff] %v369
        %435 = vst [vmem:[%s433 + $0x8] sm:$0xff] %v398
        %436 = vst [vmem:[%s433 + $0x20] sm:$0xff] %v371
        %437 = vst [vmem:[%s433 + $0x28] sm:$0xff] %v400
        %438 = vst [vmem:[%s433 + $0x40] sm:$0xff] %v374
        %439 = vst [vmem:[%s433 + $0x48] sm:$0xff] %v403
        %440 = vst [vmem:[%s433 + $0x60] sm:$0xff] %v376
        %441 = vst [vmem:[%s433 + $0x68] sm:$0xff] %v405
        %442 = vst [vmem:[%s433 + $0x80] sm:$0xff] %v379
        %443 = vst [vmem:[%s433 + $0x88] sm:$0xff] %v408
        %444 = vst [vmem:[%s433 + $0xa0] sm:$0xff] %v381
        %445 = vst [vmem:[%s433 + $0xa8] sm:$0xff] %v410
        %446 = vst [vmem:[%s433 + $0xc0] sm:$0xff] %v384
        %447 = vst [vmem:[%s433 + $0xc8] sm:$0xff] %v413
        %448 = vst [vmem:[%s433 + $0xe0] sm:$0xff] %v386
        %449 = vst [vmem:[%s433 + $0xe8] sm:$0xff] %v415
        %s450 = sand.u32 %s113, 1
        %s451 = scalar_lea.sflag [#allocation4], %s450
        %s452 = sand.u32 %s113, 1
        %s453 = smul.addr %s452, 256
        %s454 = scalar_lea.vmem [#allocation8], %s453
        // Predicated region
        $region45: #{tpu_custom_call.1} parent=31 // pred_check
          %p455 = pneg %p123
        $region46: #{tpu_custom_call.1} parent=31 // pred_check_branch
          %457 = sbr.rel (%p455) target = $region48
        $region47: #{tpu_custom_call.1} parent=31 // pred_region
          %s458 = smul.u32 8, %s26
          %460 = vsyncadd %s451, 0
          %s461 = smul.addr %s458, 4
          %s462 = smul.addr %s25, 32
          %s463 = sadd.s32 %s461, %s462
          %s464 = smul.addr %s463, 8
          %s465 = scalar_lea.hbm %s3, %s464
          %s466 = sshll.u32 %s454, 4
          %s467 = int_to_ptr.vmem [resolvable:$true] %s466
          %s468 = sshll.u32 %s465, 4
          %s469 = int_to_ptr.hbm [resolvable:$true] %s468
          %474 = dma.vmem_to_hbm [thread:$0]  %s467, 4096, %s469, %s451, 256, 256, 16
        $region48: #{tpu_custom_call.1} parent=31 // pred_fallthru
          _
      $region32: #{tpu_custom_call.1} parent=5 // pred_fallthru
        _
      %p475 = scmp.le.s32.totalorder 2, %s16
      // Predicated region
      $region49: #{tpu_custom_call.1} parent=5 // pred_check
        %p476 = pneg %p475
      $region50: #{tpu_custom_call.1} parent=5 // pred_check_branch
        %478 = sbr.rel (%p476) target = $region52
      $region51: #{tpu_custom_call.1} parent=5 // pred_region
        %s479 = ssub.s32 %s16, 2
        // Predicated region
        $region53: #{tpu_custom_call.1} parent=51 // pred_check
          %p480 = pneg %p129
        $region54: #{tpu_custom_call.1} parent=51 // pred_check_branch
          %482 = sbr.rel (%p480) target = $region56
        $region55: #{tpu_custom_call.1} parent=51 // pred_region
          %s483 = sand.u32 %s114, 1
          %s484 = scalar_lea.sflag [#allocation4], %s483
          %s485 = sand.u32 %s114, 1
          %s486 = smul.addr %s485, 256
          %s487 = scalar_lea.vmem [#allocation8], %s486
          %489 = dma.done %s484, 4096
        $region56: #{tpu_custom_call.1} parent=51 // pred_fallthru
          _
      $region52: #{tpu_custom_call.1} parent=5 // pred_fallthru
        _
    $region6: #{tpu_custom_call.1} parent=1 // loop_footer
      %s20 = sadd.s32 1, %s16
    $region7: #{tpu_custom_call.1} parent=1 // loop_footer_branch
      %15 = sbr.rel target = $region3
    $region8: #{tpu_custom_call.1} parent=1 // loop_exit
      _
    %490 = vsyncpa [#allocation3], 1
    %s491 = scalar_lea.sflag [#allocation3], 1
    %492 = vsyncpa %s491, 1
    %493 = vsyncpa [#allocation6], 1
    %494 = vsyncpa [#allocation4], 1
    %s495 = scalar_lea.sflag [#allocation4], 1
    %496 = vsyncpa %s495, 1

</llo_original>
